<compile_context>
chip_gen: v7x
topology: tpu7x:2x2x1
jax: 0.10.0
libtpu: 0.0.40
codegen_flags: <defaults>
</compile_context>

<pallas_src>
import functools

import jax
import jax.numpy as jnp
import numpy as np
from jax import lax
from jax.experimental import pallas as pl
from jax.experimental.pallas import tpu as pltpu


# --------------------------------------------------------------------------- kernel
def _ntxent_rowsum_kernel(zr_ref, zct_ref, acc_ref, *, inv_t, n_valid, block_n,
                          mask_cols):
    """Accumulates sum_{m != k} exp((cos(z_k, z_m) - 1) / T) per row of the tile."""
    j = pl.program_id(1)

    @pl.when(j == 0)
    def _init():
        # Pre-subtract the diagonal contribution exp((cos(z_k,z_k) - 1)/T); this
        # replaces masked_fill(eye, 0) with O(tm*D) work and matches the matmul's
        # own (k,k) entry since it is computed from the same (possibly bf16) operand.
        lhs = zr_ref[...].astype(jnp.float32)
        diag_cos = jnp.sum(lhs * lhs, axis=-1, keepdims=True)
        acc_ref[...] = -jnp.exp((diag_cos - 1.0) * inv_t)

    # (tm, tn) tile of cosine similarities; operands are pre-normalized, the column
    # operand is pre-transposed, so this is a plain MXU matmul with f32 accumulation.
    logits = jnp.dot(zr_ref[...], zct_ref[...],
                     preferred_element_type=jnp.float32)
    # 1/T is applied after the matmul in f32 (safe for bf16 streams and small T).
    e = jnp.exp((logits - 1.0) * inv_t)
    if mask_cols:  # compile-time constant: only emitted when zero-padding exists
        col = j * block_n + lax.broadcasted_iota(jnp.int32, e.shape, 1)
        e = jnp.where(col < n_valid, e, 0.0)
    acc_ref[...] += jnp.sum(e, axis=-1, keepdims=True)


# ------------------------------------------------------------------------- tiling
def _round_up(x, m):
    return (x + m - 1) // m * m


def _tpu_defaults():
    """Per-generation VMEM budget / limit and the bf16-streaming default."""
    kind = ""
    try:
        dev = jax.devices()[0]
        if dev.platform == "tpu":
            kind = (getattr(dev, "device_kind", "") or "").lower()
    except Exception:
        pass
    if "v7" in kind:                                   # 64 MiB VMEM per TC, 2 TCs
        return {"budget": 36 << 20, "limit": 56 << 20, "bf16_default": False}
    if "v6" in kind or "trillium" in kind:             # 128 MiB VMEM
        return {"budget": 64 << 20, "limit": 100 << 20, "bf16_default": False}
    if "v5 lite" in kind or "v5e" in kind or "v5lite" in kind:  # 128 MiB, bf16 MXU
        return {"budget": 64 << 20, "limit": 100 << 20, "bf16_default": True}
    if "v2" in kind or "v3" in kind:                   # small-VMEM parts: stay small
        return {"budget": 8 << 20, "limit": None, "bf16_default": False}
    return {"budget": 24 << 20, "limit": 48 << 20, "bf16_default": False}


def _pick_tiles(n, d, itemsize, block_m, block_n, vmem_budget):
    """Choose (tm, tn): tm multiple of 8, tn multiple of 128, sized to the budget."""
    rows8 = _round_up(max(n, 8), 8)
    cols128 = _round_up(max(n, 128), 128)

    if block_n is not None:
        tn = max(128, _round_up(block_n, 128))
    else:
        tn = 512
    tn = min(tn, cols128)

    if block_m is not None:
        tm = min(max(8, _round_up(block_m, 8)), rows8)
    else:
        tm = min(1024, rows8)
        # Prefer >= 2 row tiles so the "parallel" row axis can split across the two
        # TensorCores on v7x (cheap: only binds when the whole problem is small).
        if rows8 >= 16:
            tm = min(tm, _round_up((rows8 + 1) // 2, 8))

    def vmem_need(tm_, tn_):
        return (2 * tm_ * d * itemsize      # resident row tile (double-buffered)
                + 2 * d * tn_ * itemsize    # streaming column tile (double-buffered)
                + 2 * tm_ * tn_ * 4         # logits / exp f32 intermediates
                + 4 * tm_ * 4)              # (tm, 1) accumulator/output buffers

    # Shrink to the per-generation budget: tn first (large-D case), then tm.
    while vmem_need(tm, tn) > vmem_budget and (tn > 128 or tm > 8):
        if tn > 128:
            tn = max(128, (tn // 2) // 128 * 128)
        else:
            tm = max(8, (tm // 2) // 8 * 8)
    return tm, tn


# ------------------------------------------------------------------------ wrapper
def ntxent_loss(z_i, z_j, temperature=0.5, *, block_m=None, block_n=None,
                use_bf16_matmul=None, vmem_budget_bytes=None,
                vmem_limit_bytes=None):
    assert z_i.shape == z_j.shape and z_i.ndim == 2, "z_i / z_j must be (B, D)"
    b, d = z_i.shape
    n = 2 * b

    defaults = _tpu_defaults()
    if use_bf16_matmul is None:
        use_bf16_matmul = defaults["bf16_default"]
    if vmem_budget_bytes is None:
        vmem_budget_bytes = defaults["budget"]
    if vmem_limit_bytes is None:
        vmem_limit_bytes = defaults["limit"]
    compute_dtype = jnp.bfloat16 if use_bf16_matmul else jnp.float32
    itemsize = jnp.dtype(compute_dtype).itemsize
    inv_t = np.float32(1.0 / temperature)

    # ---- O(N*D) prologue (plain XLA, outside the N^2 hot loop):
    # concat, single L2 normalization, positive-pair logits.
    # TODO(synk): eps clamps each row norm at 1e-8; the reference clamps the *product*
    # of norms at 1e-8 — identical unless a row is numerically zero.
    z = jnp.concatenate([z_i, z_j], axis=0).astype(jnp.float32)
    norm = jnp.sqrt(jnp.sum(z * z, axis=-1, keepdims=True))
    z_hat = z / jnp.maximum(norm, 1e-8)
    pos_cos = jnp.sum(z_hat[:b] * z_hat[b:], axis=-1)        # cos(z_i, z_j), (B,)
    pos_cos = jnp.concatenate([pos_cos, pos_cos], axis=0)    # (2B,)

    # ---- tiling / padding (cdiv grid; padded columns masked in-kernel, padded rows
    # produce garbage that is simply sliced off below).
    tm, tn = _pick_tiles(n, d, itemsize, block_m, block_n, vmem_budget_bytes)
    rows_pad = _round_up(n, tm)
    cols_pad = _round_up(n, tn)

    z_rows = z_hat.astype(compute_dtype)                     # (2B, D) row stream
    if rows_pad != n:
        z_rows = jnp.pad(z_rows, ((0, rows_pad - n), (0, 0)))
    z_cols_t = z_hat.T.astype(compute_dtype)                 # (D, 2B) column stream
    if cols_pad != n:
        z_cols_t = jnp.pad(z_cols_t, ((0, 0), (0, cols_pad - n)))

    grid = (rows_pad // tm, cols_pad // tn)
    kernel = functools.partial(
        _ntxent_rowsum_kernel,
        inv_t=inv_t, n_valid=n, block_n=tn, mask_cols=(cols_pad != n))

    row_sums = pl.pallas_call(
        kernel,
        out_shape=jax.ShapeDtypeStruct((rows_pad, 1), jnp.float32),
        grid_spec=pltpu.PrefetchScalarGridSpec(
            num_scalar_prefetch=0,
            grid=grid,
            in_specs=[
                # normalized row tile: resident across the entire column sweep
                pl.BlockSpec((tm, d), lambda i, j: (i, 0)),
                # (D, tn) normalized, transposed column tile: the only operand that
                # moves every grid step.
                # TODO(synk): add pipeline_mode=pl.Buffered(3) here if profiling shows
                # exposed column DMA for very small D.
                pl.BlockSpec((d, tn), lambda i, j: (0, j)),
            ],
            # Output block doubles as the per-row exp-sum accumulator (same block
            # across the j reduction axis).
            out_specs=pl.BlockSpec((tm, 1), lambda i, j: (i, 0)),
        ),
        compiler_params=pltpu.CompilerParams(
            dimension_semantics=("parallel", "arbitrary"),
            vmem_limit_bytes=vmem_limit_bytes),
    )(z_rows, z_cols_t)

    # ---- O(N) epilogue: loss_k = log(sum_{m != k} exp(s_km)) - s_{k,pos},
    # with row_sums = sum exp(s_km - 1/T), so the +1/T below cancels the shift.
    acc = row_sums[:n, 0]
    loss = jnp.log(acc) + inv_t - pos_cos * inv_t
    return jnp.mean(loss)


# ---------------------------------------------------------------------- reference
def _ntxent_loss_ref(z_i, z_j, temperature=0.5):
    """Pure-JAX reference matching the PyTorch module."""
    b = z_i.shape[0]
    z = jnp.concatenate([z_i, z_j], axis=0)
    norms = jnp.sqrt(jnp.sum(z * z, axis=-1, keepdims=True))
    denom = jnp.maximum(norms * norms.T, 1e-8)
    sim = (z @ z.T) / denom / temperature
    e = jnp.exp(sim)
    mask = jnp.eye(2 * b, dtype=bool)
    sim_sum = jnp.sum(jnp.where(mask, 0.0, e), axis=1)
    cos_ij = jnp.sum(z_i * z_j, axis=-1) / jnp.maximum(
        jnp.linalg.norm(z_i, axis=-1) * jnp.linalg.norm(z_j, axis=-1), 1e-8)
    pos = jnp.exp(cos_ij / temperature)
    pos = jnp.concatenate([pos, pos], axis=0)
    return jnp.mean(-jnp.log(pos / sim_sum))


if __name__ == "__main__":
    key = jax.random.PRNGKey(0)
    k1, k2, k3, k4 = jax.random.split(key, 4)

    # Case 1: small synthetic batch (B=8, D=32), f32 path, default tiling
    # (grid = (2, 1) with a masked 128-wide column tile).
    B, D = 8, 32
    z_i = jax.random.normal(k1, (B, D), dtype=jnp.float32)
    z_j = jax.random.normal(k2, (B, D), dtype=jnp.float32)
    out = jax.block_until_ready(
        ntxent_loss(z_i, z_j, temperature=0.5, use_bf16_matmul=False))
    ref = jax.block_until_ready(_ntxent_loss_ref(z_i, z_j, temperature=0.5))
    np.testing.assert_allclose(np.asarray(out), np.asarray(ref),
                               rtol=1e-5, atol=1e-5)

    # Case 2: B not a multiple of 8, forced 128-wide column tiles -> exercises the
    # cdiv grid, padded rows, padded-column masking and the multi-step j reduction
    # (grid = (2, 2)).
    B2, D2 = 70, 48
    z_i2 = jax.random.normal(k3, (B2, D2), dtype=jnp.float32)
    z_j2 = jax.random.normal(k4, (B2, D2), dtype=jnp.float32)
    out2 = jax.block_until_ready(
        ntxent_loss(z_i2, z_j2, temperature=0.5, block_m=72, block_n=128,
                    use_bf16_matmul=False))
    ref2 = jax.block_until_ready(_ntxent_loss_ref(z_i2, z_j2, temperature=0.5))
    np.testing.assert_allclose(np.asarray(out2), np.asarray(ref2),
                               rtol=1e-4, atol=1e-4)

    # Case 3: bf16 streaming path (the default on v5e), loose tolerance.
    out3 = jax.block_until_ready(
        ntxent_loss(z_i2, z_j2, temperature=0.5, block_m=72, block_n=128,
                    use_bf16_matmul=True))
    np.testing.assert_allclose(np.asarray(out3), np.asarray(ref2),
                               rtol=2e-2, atol=2e-2)

    print("KERNEL_OK")
</pallas_src>

<mosaic_0001>
module attributes {stable_mosaic.version = 11 : i64} {
  func.func @_ntxent_rowsum_kernel(%arg0: i32, %arg1: i32, %arg2: memref<8x32xf32, #tpu.memory_space<vmem>>, %arg3: memref<32x128xf32, #tpu.memory_space<vmem>>, %arg4: memref<8x1xf32, #tpu.memory_space<vmem>>) attributes {dimension_semantics = [#tpu.dimension_semantics<parallel>, #tpu.dimension_semantics<arbitrary>], iteration_bounds = array<i64: 2, 1>, scalar_prefetch = 0 : i64, scratch_operands = 0 : i64, tpu.core_type = #tpu.core_type<tc>, window_params = [{transform_indices = @transform_0, window_bounds = array<i64: 8, 32>}, {transform_indices = @transform_1, window_bounds = array<i64: 32, 128>}, {transform_indices = @transform_2, window_bounds = array<i64: 8, 1>}]} {
    %c0_i32 = arith.constant 0 : i32
    %0 = arith.cmpi eq, %arg1, %c0_i32 : i32
    %1 = arith.extui %0 : i1 to i32
    %c0_i32_0 = arith.constant 0 : i32
    %2 = arith.cmpi ne, %1, %c0_i32_0 : i32
    scf.if %2 {
      %c0_12 = arith.constant 0 : index
      %c0_13 = arith.constant 0 : index
      %24 = vector.load %arg2[%c0_12, %c0_13] : memref<8x32xf32, #tpu.memory_space<vmem>>, vector<8x32xf32>
      %25 = arith.mulf %24, %24 : vector<8x32xf32>
      %cst_14 = arith.constant dense<0.000000e+00> : vector<8xf32>
      %26 = vector.multi_reduction <add>, %25, %cst_14 [1] : vector<8x32xf32> to vector<8xf32>
      %27 = vector.shape_cast %26 : vector<8xf32> to vector<8x1xf32>
      %cst_15 = arith.constant 1.000000e+00 : f32
      %28 = vector.broadcast %cst_15 : f32 to vector<8x1xf32>
      %29 = arith.subf %27, %28 : vector<8x1xf32>
      %cst_16 = arith.constant 2.000000e+00 : f32
      %30 = vector.broadcast %cst_16 : f32 to vector<8x1xf32>
      %31 = arith.mulf %29, %30 : vector<8x1xf32>
      %32 = math.exp %31 : vector<8x1xf32>
      %cst_17 = arith.constant 0.000000e+00 : f32
      %33 = vector.broadcast %cst_17 : f32 to vector<8x1xf32>
      %34 = arith.subf %33, %32 : vector<8x1xf32>
      %c0_18 = arith.constant 0 : index
      %c0_19 = arith.constant 0 : index
      %35 = vector.load %arg4[%c0_18, %c0_19] : memref<8x1xf32, #tpu.memory_space<vmem>>, vector<8x1xf32>
      tpu.vector_store %arg4[%c0_18, %c0_19], %34 {strides = array<i32>} : memref<8x1xf32, #tpu.memory_space<vmem>>, vector<8x1xf32>,
    } else {
    }
    %c0 = arith.constant 0 : index
    %c0_1 = arith.constant 0 : index
    %3 = vector.load %arg2[%c0, %c0_1] : memref<8x32xf32, #tpu.memory_space<vmem>>, vector<8x32xf32>
    %c0_2 = arith.constant 0 : index
    %c0_3 = arith.constant 0 : index
    %4 = vector.load %arg3[%c0_2, %c0_3] : memref<32x128xf32, #tpu.memory_space<vmem>>, vector<32x128xf32>
    %cst = arith.constant dense<0.000000e+00> : vector<8x128xf32>
    %5 = tpu.matmul %3, %4, %cst {dimension_numbers = #tpu.dot_dimension_numbers<[1], [0], [0], [1], [0, 0, 1, 1], [], []>} : vector<8x32xf32>, vector<32x128xf32>, vector<8x128xf32> -> vector<8x128xf32>
    %cst_4 = arith.constant 1.000000e+00 : f32
    %6 = vector.broadcast %cst_4 : f32 to vector<8x128xf32>
    %7 = arith.subf %5, %6 : vector<8x128xf32>
    %cst_5 = arith.constant 2.000000e+00 : f32
    %8 = vector.broadcast %cst_5 : f32 to vector<8x128xf32>
    %9 = arith.mulf %7, %8 : vector<8x128xf32>
    %10 = math.exp %9 : vector<8x128xf32>
    %c128_i32 = arith.constant 128 : i32
    %11 = arith.muli %arg1, %c128_i32 : i32
    %12 = tpu.iota {dimensions = array<i32: 1>} : vector<8x128xi32>
    %13 = vector.broadcast %11 : i32 to vector<8x128xi32>
    %14 = arith.addi %13, %12 : vector<8x128xi32>
    %c16_i32 = arith.constant 16 : i32
    %15 = vector.broadcast %c16_i32 : i32 to vector<8x128xi32>
    %16 = arith.cmpi slt, %14, %15 : vector<8x128xi32>
    %cst_6 = arith.constant 0.000000e+00 : f32
    %17 = vector.broadcast %cst_6 : f32 to vector<8x128xf32>
    %18 = arith.select %16, %10, %17 : vector<8x128xi1>, vector<8x128xf32>
    %c0_7 = arith.constant 0 : index
    %c0_8 = arith.constant 0 : index
    %19 = vector.load %arg4[%c0_7, %c0_8] : memref<8x1xf32, #tpu.memory_space<vmem>>, vector<8x1xf32>
    %cst_9 = arith.constant dense<0.000000e+00> : vector<8xf32>
    %20 = vector.multi_reduction <add>, %18, %cst_9 [1] : vector<8x128xf32> to vector<8xf32>
    %21 = vector.shape_cast %20 : vector<8xf32> to vector<8x1xf32>
    %22 = arith.addf %19, %21 : vector<8x1xf32>
    %c0_10 = arith.constant 0 : index
    %c0_11 = arith.constant 0 : index
    %23 = vector.load %arg4[%c0_10, %c0_11] : memref<8x1xf32, #tpu.memory_space<vmem>>, vector<8x1xf32>
    tpu.vector_store %arg4[%c0_10, %c0_11], %22 {strides = array<i32>} : memref<8x1xf32, #tpu.memory_space<vmem>>, vector<8x1xf32>,
    return
  }
  func.func @transform_0(%arg0: i32, %arg1: i32) -> (i32, i32) {
    %c0_i32 = arith.constant 0 : i32
    %c0_i32_0 = arith.constant 0 : i32
    return %arg0, %c0_i32 : i32, i32
  }
  func.func @transform_1(%arg0: i32, %arg1: i32) -> (i32, i32) {
    %c0_i32 = arith.constant 0 : i32
    %c0_i32_0 = arith.constant 0 : i32
    return %c0_i32, %arg1 : i32, i32
  }
  func.func @transform_2(%arg0: i32, %arg1: i32) -> (i32, i32) {
    %c0_i32 = arith.constant 0 : i32
    %c0_i32_0 = arith.constant 0 : i32
    return %arg0, %c0_i32 : i32, i32
  }
}

</mosaic_0001>

<llo_original>
// kernel: tpu_custom_call.1
$region0: #{tpu_custom_call.1}
  #allocation0 [shape = 'u32[]', space=smem, size = 0x4, offset = 0x4, fixed_abs, tag = 'smem constant byte address 0x4 - core index']
  #allocation1 [shape = 'u32[144,128]{1,0:T(1,128)}', space=vmem, size = 0x12000, scoped, tag = 'internal scratch']
  %s0 = inlined_call_operand.hbm [shape: f32[16,32], index: 0, kind: input, shape index: {}]
  %s1 = inlined_call_operand.hbm [shape: f32[32,128], index: 1, kind: input, shape index: {}]
  %s2 = inlined_call_operand.vmem [shape: f32[16,1], index: 2, kind: output, shape index: {}]
  %s3 = sld [smem:[#allocation0]]
  $region53: #{tpu_custom_call.1} parent=0
    _
  %s5 = ssub.s32 1, %s3
  %s6 = scalar_select 0, %s5, %s3
  $region1: #{tpu_custom_call.1} parent=0
    #allocation2 [shape = 'u8[8192]{0}', space=vmem, size = 0x2000, scoped, tag = 'input window, operand 0']
    #allocation3 [shape = 's32[2]{0}', space=sflag, size = 0x8, scoped, tag = 'scoped memory for tpu_custom_call.1']
    #allocation4 [shape = 'u8[16384]{0}', space=vmem, size = 0x4000, scoped, tag = 'input window, operand 1, single buffered']
    #allocation5 [shape = 's32[1]{0}', space=sflag, size = 0x4, scoped, tag = 'scoped memory for tpu_custom_call.1']
    %7 = vsyncpa [#allocation3], 0
    %s8 = scalar_lea.sflag [#allocation3], 1
    %9 = vsyncpa %s8, 0
    %10 = vsyncpa [#allocation5], 0
    loop: start=0, step=1, limit=4
    $region2: #{tpu_custom_call.1} parent=1 // loop_pre_header
      _
    $region3: #{tpu_custom_call.1} parent=1 // loop_header
      %s12 = sphi 0, %s16
      %p13 = scmp.ge.s32.totalorder %s12, 4
      %s19 = sphi 0, %s31
      %s20 = sphi 0, %s27
      %s21 = sphi 0, %s19
      %s22 = sphi 0, %s20
      %s23 = sphi 0, %s21
      %s24 = sphi 0, %s22
      %s34 = sphi 0, %s36
      %s37 = sphi 0, %s34
      %s38 = sphi 0, %s37
      %s54 = sphi 0, %s38
      %s60 = sphi 0, %s62
      %s63 = sphi 0, %s60
      %s64 = sphi 0, %s63
      %s80 = sphi 0, %s64
      %s86 = sphi 0, %s88
      %s89 = sphi 0, %s86
      %s90 = sphi 0, %s89
      %s106 = sphi 0, %s90
    $region4: #{tpu_custom_call.1} parent=1 // loop_header_branch
      %15 = sbr.rel (%p13) target = $region8
    $region5: #{tpu_custom_call.1} parent=1 // loop_body
      %s17 = ssub.s32 %s12, 1
      %s18 = ssub.s32 %s12, 2
      %s25 = sadd.s32 1, %s20
      %p26 = scmp.ge.s32.totalorder %s25, 1
      %s27 = scalar_select %p26, 0, %s25
      %s28 = sadd.s32 1, %s19
      %s29 = scalar_select %p26, %s28, %s19
      %p30 = scmp.ge.s32.totalorder %s29, 2
      %s31 = scalar_select %p30, 0, %s29
      %s32 = ssub.s32 %s19, %s31
      %p33 = scmp.eq.s32.totalorder %s32, 0
      %s35 = sadd.s32 %s34, 1
      %s36 = scalar_select %p33, %s34, %s35
      %p39 = pneg %p33
      %p40 = scmp.eq.s32.totalorder %s12, 1
      %p41 = por %p39, %p40
      %p42 = scmp.ne.s32.totalorder %s34, %s37
      %p43 = scmp.eq.s32.totalorder %s12, 0
      %p44 = por %p42, %p43
      %p45 = scmp.ne.s32.totalorder %s34, %s37
      %p46 = scmp.eq.s32.totalorder %s17, 1
      %p47 = por %p45, %p46
      %p48 = scmp.ne.s32.totalorder %s37, %s38
      %p49 = scmp.eq.s32.totalorder %s17, 0
      %p50 = por %p48, %p49
      %p51 = scmp.ne.s32.totalorder %s37, %s38
      %p52 = scmp.eq.s32.totalorder %s18, 1
      %p53 = por %p51, %p52
      %p55 = scmp.ne.s32.totalorder %s38, %s54
      %p56 = scmp.eq.s32.totalorder %s18, 0
      %p57 = por %p55, %p56
      %s58 = ssub.s32 %s20, %s27
      %p59 = scmp.eq.s32.totalorder %s58, 0
      %s61 = sadd.s32 %s60, 1
      %s62 = scalar_select %p59, %s60, %s61
      %p65 = pneg %p59
      %p66 = scmp.eq.s32.totalorder %s12, 1
      %p67 = por %p65, %p66
      %p68 = scmp.ne.s32.totalorder %s60, %s63
      %p69 = scmp.eq.s32.totalorder %s12, 0
      %p70 = por %p68, %p69
      %p71 = scmp.ne.s32.totalorder %s60, %s63
      %p72 = scmp.eq.s32.totalorder %s17, 1
      %p73 = por %p71, %p72
      %p74 = scmp.ne.s32.totalorder %s63, %s64
      %p75 = scmp.eq.s32.totalorder %s17, 0
      %p76 = por %p74, %p75
      %p77 = scmp.ne.s32.totalorder %s63, %s64
      %p78 = scmp.eq.s32.totalorder %s18, 1
      %p79 = por %p77, %p78
      %p81 = scmp.ne.s32.totalorder %s64, %s80
      %p82 = scmp.eq.s32.totalorder %s18, 0
      %p83 = por %p81, %p82
      %s84 = ssub.s32 %s19, %s31
      %p85 = scmp.eq.s32.totalorder %s84, 0
      %s87 = sadd.s32 %s86, 1
      %s88 = scalar_select %p85, %s86, %s87
      %p91 = pneg %p85
      %p92 = scmp.eq.s32.totalorder %s12, 1
      %p93 = por %p91, %p92
      %p94 = scmp.ne.s32.totalorder %s86, %s89
      %p95 = scmp.eq.s32.totalorder %s12, 0
      %p96 = por %p94, %p95
      %p97 = scmp.ne.s32.totalorder %s86, %s89
      %p98 = scmp.eq.s32.totalorder %s17, 1
      %p99 = por %p97, %p98
      %p100 = scmp.ne.s32.totalorder %s89, %s90
      %p101 = scmp.eq.s32.totalorder %s17, 0
      %p102 = por %p100, %p101
      %p103 = scmp.ne.s32.totalorder %s89, %s90
      %p104 = scmp.eq.s32.totalorder %s18, 1
      %p105 = por %p103, %p104
      %p107 = scmp.ne.s32.totalorder %s90, %s106
      %p108 = scmp.eq.s32.totalorder %s18, 0
      %p109 = por %p107, %p108
      %p110 = scmp.le.s32.totalorder 1, %s12
      %p111 = scmp.lt.s32.totalorder %s12, 3
      %p112 = pnand %p110, %p111
      %p113 = pneg %p112
      // Predicated region
      $region9: #{tpu_custom_call.1} parent=5 // pred_check
        _
      $region10: #{tpu_custom_call.1} parent=5 // pred_check_branch
        %115 = sbr.rel (%p112) target = $region12
      $region11: #{tpu_custom_call.1} parent=5 // pred_region
        %s116 = ssub.s32 %s12, 1
        // Predicated region
        $region13: #{tpu_custom_call.1} parent=11 // pred_check
          %p117 = pneg %p76
        $region14: #{tpu_custom_call.1} parent=11 // pred_check_branch
          %119 = sbr.rel (%p117) target = $region16
        $region15: #{tpu_custom_call.1} parent=11 // pred_region
          %s121 = ssub.s32 512, 512
          %122 = vsyncadd [#allocation5], %s121
          %s123 = smul.addr %s22, 128
          %s124 = scalar_lea.hbm %s1, %s123
          %s125 = sshll.u32 [#allocation4], 4
          %s126 = int_to_ptr.vmem [resolvable:$true] %s125
          %131 = dma.hbm_to_vmem [thread:$0]  %s124, 512, %s126, [#allocation5], 128, 128, 8
        $region16: #{tpu_custom_call.1} parent=11 // pred_fallthru
          _
      $region12: #{tpu_custom_call.1} parent=5 // pred_fallthru
        _
      %p132 = scmp.lt.s32.totalorder %s12, 2
      // Predicated region
      $region17: #{tpu_custom_call.1} parent=5 // pred_check
        %p133 = pneg %p132
      $region18: #{tpu_custom_call.1} parent=5 // pred_check_branch
        %135 = sbr.rel (%p133) target = $region20
      $region19: #{tpu_custom_call.1} parent=5 // pred_region
        // Predicated region
        $region21: #{tpu_custom_call.1} parent=19 // pred_check
          %p136 = pneg %p44
        $region22: #{tpu_custom_call.1} parent=19 // pred_check_branch
          %138 = sbr.rel (%p136) target = $region24
        $region23: #{tpu_custom_call.1} parent=19 // pred_region
          %s139 = sand.u32 %s34, 1
          %s140 = scalar_lea.sflag [#allocation3], %s139
          %s141 = sand.u32 %s34, 1
          %s142 = smul.addr %s141, 8
          %s143 = scalar_lea.vmem [#allocation2], %s142
          %s145 = ssub.s32 128, 128
          %146 = vsyncadd %s140, %s145
          %s147 = smul.addr %s19, 128
          %s148 = scalar_lea.hbm %s0, %s147
          %s150 = sshll.u32 %s143, 4
          %s151 = int_to_ptr.vmem [resolvable:$true] %s150
          %153 = dma.hbm_to_vmem [thread:$0]  %s148, 128, %s151, %s140
        $region24: #{tpu_custom_call.1} parent=19 // pred_fallthru
          _
      $region20: #{tpu_custom_call.1} parent=5 // pred_fallthru
        _
      %p154 = scmp.le.s32.totalorder 1, %s12
      %p155 = scmp.lt.s32.totalorder %s12, 3
      %p156 = pnand %p154, %p155
      %p157 = pneg %p156
      // Predicated region
      $region25: #{tpu_custom_call.1} parent=5 // pred_check
        _
      $region26: #{tpu_custom_call.1} parent=5 // pred_check_branch
        %159 = sbr.rel (%p156) target = $region28
      $region27: #{tpu_custom_call.1} parent=5 // pred_region
        %s160 = ssub.s32 %s12, 1
        %s161 = sand.u32 %s37, 1
        %s162 = scalar_lea.sflag [#allocation3], %s161
        %s163 = sand.u32 %s37, 1
        %s164 = smul.addr %s163, 8
        %s165 = scalar_lea.vmem [#allocation2], %s164
        // Predicated region
        $region29: #{tpu_custom_call.1} parent=27 // pred_check
          %p166 = pneg %p50
        $region30: #{tpu_custom_call.1} parent=27 // pred_check_branch
          %168 = sbr.rel (%p166) target = $region32
        $region31: #{tpu_custom_call.1} parent=27 // pred_region
          %169 = dma.done %s162, 128
        $region32: #{tpu_custom_call.1} parent=27 // pred_fallthru
          _
        // Predicated region
        $region33: #{tpu_custom_call.1} parent=27 // pred_check
          %p170 = pneg %p76
        $region34: #{tpu_custom_call.1} parent=27 // pred_check_branch
          %172 = sbr.rel (%p170) target = $region36
        $region35: #{tpu_custom_call.1} parent=27 // pred_region
          %173 = dma.done [#allocation5], 512
        $region36: #{tpu_custom_call.1} parent=27 // pred_fallthru
          _
        %s174 = sand.u32 %s37, 1
        %s175 = scalar_lea.sflag [#allocation3], %s174
        %s176 = sand.u32 %s37, 1
        %s177 = smul.addr %s176, 8
        %s178 = scalar_lea.vmem [#allocation2], %s177
        %p179 = pneg %p50
        %p180 = pneg %p47
        %p181 = pneg %p76
        %p182 = pneg %p73
        %p183 = pneg %p102
        %p184 = pneg %p99
        %p185 = scmp.lt.s32.totalorder %s21, 1
        %s186 = scalar_select %p185, %s21, 1
        %s187 = smul.addr %s186, 8
        %s188 = scalar_lea.vmem %s2, %s187
        %p189 = scmp.lt.s32.totalorder %s21, 1
        %s190 = scalar_select %p189, %s21, 1
        %s191 = smul.addr %s190, 8
        %s192 = scalar_lea.vmem %s2, %s191
        %p193 = scmp.eq.s32.totalorder %s22, 0
        // Predicated region
        $region37: #{tpu_custom_call.1} parent=27 // pred_check
          %p194 = pneg %p193
        $region38: #{tpu_custom_call.1} parent=27 // pred_check_branch
          %196 = sbr.rel (%p194) target = $region40
        $region39: #{tpu_custom_call.1} parent=27 // pred_region
          %v197 = vld [vmem:[%s165] sm:$0xff]
          %v198 = vmul.f32 %v197, %v197
          %vm199 = vcmask 261120
          %v200 = vsel %vm199, %v198, 0.0
          %201 = vadd.xlane.f32.xlu0 %v200
          %v202 = vpop.xlane.xlu0 %201
          %v203 = vsub.f32 %v202, 1.0
          %v204 = vmul.f32 %v203, 2.0
          %v205 = vmul.f32 %v204, 1.442695
          %v206 = vpow.pop %v205
          %v207 = vsub.f32 0.0, %v206
          %vm208 = vcmask 7168
          %209 = vst.msk [vmem:[%s192] sm:$0xff] %vm208, %v207
        $region40: #{tpu_custom_call.1} parent=27 // pred_fallthru
          _
        %v210 = vld [vmem:[%s165] sm:$0xff]
        %v211 = vld [vmem:[#allocation4] sm:$0xff]
        %v212 = vld [vmem:[#allocation4 + $0x8] sm:$0xff]
        %v213 = vld [vmem:[#allocation4 + $0x10] sm:$0xff]
        %v214 = vld [vmem:[#allocation4 + $0x18] sm:$0xff]
        %vm215 = vcmask 261120
        %v217 = vsel %vm215, %v210, 0
        %219 = vmatprep.subr.mxu0 0.0
        %220 = vmatpush1.msra.mxu0 %v211
        %221 = vmatprep.subr.mxu0 0.0
        %222 = vmatpush1.msra.mxu0 %v212
        %223 = vmatprep.subr.mxu0 0.0
        %224 = vmatpush1.msra.mxu0 %v213
        %225 = vmatprep.subr.mxu0 0.0
        %226 = vmatpush1.msra.mxu0 %v214
        %227 = vmatprep.subr.mxu0 0.0
        %228 = vmatpush1.msra.mxu0 0.0
        %229 = vmatprep.subr.mxu0 0.0
        %230 = vmatpush1.msra.mxu0 0.0
        %231 = vmatprep.subr.mxu0 0.0
        %232 = vmatpush1.msra.mxu0 0.0
        %233 = vmatprep.subr.mxu0 0.0
        %234 = vmatpush1.msra.mxu0 0.0
        %235 = vmatprep.subr.mxu0 0.0
        %236 = vmatpush1.msra.mxu0 0.0
        %237 = vmatprep.subr.mxu0 0.0
        %238 = vmatpush1.msra.mxu0 0.0
        %239 = vmatprep.subr.mxu0 0.0
        %240 = vmatpush1.msra.mxu0 0.0
        %241 = vmatprep.subr.mxu0 0.0
        %242 = vmatpush1.msra.mxu0 0.0
        %243 = vmatprep.subr.mxu0 0.0
        %244 = vmatpush1.msra.mxu0 0.0
        %245 = vmatprep.subr.mxu0 0.0
        %246 = vmatpush1.msra.mxu0 0.0
        %247 = vmatprep.subr.mxu0 0.0
        %248 = vmatpush1.msra.mxu0 0.0
        %249 = vmatprep.subr.mxu0 0.0
        %250 = vmatpush1.msra.mxu0 0.0
        %251 = vmatprep.subr.mxu0 0.0
        %252 = vmatpush1.msra.mxu0 0.0
        %253 = vmatprep.subr.mxu0 0.0
        %254 = vmatpush1.msra.mxu0 0.0
        %255 = vmatprep.subr.mxu0 0.0
        %256 = vmatpush1.msra.mxu0 0.0
        %257 = vmatprep.subr.mxu0 0.0
        %258 = vmatpush1.msra.mxu0 0.0
        %259 = vmatprep.subr.mxu0 0.0
        %260 = vmatpush1.msra.mxu0 0.0
        %261 = vmatprep.subr.mxu0 0.0
        %262 = vmatpush1.msra.mxu0 0.0
        %263 = vmatprep.subr.mxu0 0.0
        %264 = vmatpush1.msra.mxu0 0.0
        %265 = vmatprep.subr.mxu0 0.0
        %266 = vmatpush1.msra.mxu0 0.0
        %267 = vmatprep.subr.mxu0 0.0
        %268 = vmatpush1.msra.mxu0 0.0
        %269 = vmatprep.subr.mxu0 0.0
        %270 = vmatpush1.msra.mxu0 0.0
        %271 = vmatprep.subr.mxu0 0.0
        %272 = vmatpush1.msra.mxu0 0.0
        %273 = vmatprep.subr.mxu0 0.0
        %274 = vmatpush1.msra.mxu0 0.0
        %275 = vmatprep.subr.mxu0 0.0
        %276 = vmatpush1.msra.mxu0 0.0
        %277 = vmatprep.subr.mxu0 0.0
        %278 = vmatpush1.msra.mxu0 0.0
        %279 = vmatprep.subr.mxu0 0.0
        %280 = vmatpush1.msra.mxu0 0.0
        %281 = vmatprep.subr.mxu0 0.0
        %282 = vmatpush1.msra.mxu0 0.0
        %283 = vmatprep.mubr.f32.mxu0 0.0
        %284 = vmatmul.mubr.f32.gmra.mrb[0].mxu0 %v217
        %v285 = vpop.f32.mrb[0].mxu0
        %v286 = vadd.f32 0.0, %v285
        %v287 = vpop.f32.mrb[0].mxu0
        %288 = vdwg.mxu0
        %v289 = vsub.f32 %v286, 1.0
        %v290 = vmul.f32 %v289, 2.0
        %v291 = vmul.f32 %v290, 1.442695
        %v292 = vpow.pop %v291
        %s293 = smul.u32 %s22, 128
        %v294 = vlaneseq
        %v295 = vand.u32 %v294, 127
        %v296 = vstv %s293
        %v297 = vadd.s32 %v296, %v295
        %vm298 = vcmp.lt.s32.totalorder %v297, 16
        %v299 = vsel %vm298, %v292, 0.0
        %v300 = vld [vmem:[%s192] sm:$0xff]
        %301 = vadd.xlane.f32.xlu0 %v299
        %v302 = vpop.xlane.xlu0 %301
        %v303 = vadd.f32 %v300, %v302
        %vm304 = vcmask 7168
        %305 = vst.msk [vmem:[%s192] sm:$0xff] %vm304, %v303
        %p306 = scmp.lt.s32.totalorder %s21, 1
        %s307 = scalar_select %p306, %s21, 1
        %s308 = smul.addr %s307, 8
        %s309 = scalar_lea.vmem %s2, %s308
        // Predicated region
        $region41: #{tpu_custom_call.1} parent=27 // pred_check
          %p310 = pneg %p99
        $region42: #{tpu_custom_call.1} parent=27 // pred_check_branch
          %312 = sbr.rel (%p310) target = $region44
        $region43: #{tpu_custom_call.1} parent=27 // pred_region
          _
        $region44: #{tpu_custom_call.1} parent=27 // pred_fallthru
          _
      $region28: #{tpu_custom_call.1} parent=5 // pred_fallthru
        _
      %p313 = scmp.le.s32.totalorder 2, %s12
      // Predicated region
      $region45: #{tpu_custom_call.1} parent=5 // pred_check
        %p314 = pneg %p313
      $region46: #{tpu_custom_call.1} parent=5 // pred_check_branch
        %316 = sbr.rel (%p314) target = $region48
      $region47: #{tpu_custom_call.1} parent=5 // pred_region
        %s317 = ssub.s32 %s12, 2
        // Predicated region
        $region49: #{tpu_custom_call.1} parent=47 // pred_check
          %p318 = pneg %p105
        $region50: #{tpu_custom_call.1} parent=47 // pred_check_branch
          %320 = sbr.rel (%p318) target = $region52
        $region51: #{tpu_custom_call.1} parent=47 // pred_region
          %p321 = scmp.lt.s32.totalorder %s23, 1
          %s322 = scalar_select %p321, %s23, 1
          %s323 = smul.addr %s322, 8
          %s324 = scalar_lea.vmem %s2, %s323
        $region52: #{tpu_custom_call.1} parent=47 // pred_fallthru
          _
      $region48: #{tpu_custom_call.1} parent=5 // pred_fallthru
        _
    $region6: #{tpu_custom_call.1} parent=1 // loop_footer
      %s16 = sadd.s32 1, %s12
    $region7: #{tpu_custom_call.1} parent=1 // loop_footer_branch
      %11 = sbr.rel target = $region3
    $region8: #{tpu_custom_call.1} parent=1 // loop_exit
      _
    %325 = vsyncpa [#allocation3], 1
    %s326 = scalar_lea.sflag [#allocation3], 1
    %327 = vsyncpa %s326, 1
    %328 = vsyncpa [#allocation5], 1

</llo_original>
